<compile_context>
chip_gen: v6e
topology: v6e:2x2x1
jax: 0.10.0
libtpu: 0.0.40
codegen_flags: <defaults>
</compile_context>

<pallas_src>
import functools

import jax
import jax.numpy as jnp
from jax.experimental import pallas as pl
from jax.experimental.pallas import tpu as pltpu


def _conv_relu_pool_kernel(x_ref, w_ref, o_ref, *, K, Cin, Lout, Bt):
    """Fused Conv1d + bias + ReLU + MaxPool1d(2) for one batch tile.

    x_ref : (1, 2*Cin, Bt, Wh) bf16 -- rows 0..Cin-1 are the even columns of
            the zero-padded input, rows Cin..2*Cin-1 the odd columns;
            Wh = Lout + K//2.
    w_ref : (Cout, K*Cin + 1) bf16 -- conv taps in (k, cin) row order, last
            column is the bias (paired with a ones row in the im2col).
    o_ref : (1, Cout, Bt*Lout)     -- pooled output, lane-dense slab with
            column order (batch-row, out-pos).
    """
    x = x_ref[0]                      # (2*Cin, Bt, Wh) bf16
    xe = x[:Cin]                      # even-column phase source
    xo = x[Cin:]                      # odd-column phase source
    half = Bt * Lout

    def phase_cols(phase):
        # im2col block for conv outputs at even positions 2j (phase 0) or odd
        # positions 2j+1 (phase 1); rows ordered (k, cin), cols ordered (b, j).
        row_blocks = []
        for k in range(K):
            if phase == 0:
                src = xe if k % 2 == 0 else xo
                off = k // 2
            else:
                src = xo if k % 2 == 0 else xe
                off = k // 2 if k % 2 == 0 else (k + 1) // 2
            win = src[:, :, off:off + Lout]               # (Cin, Bt, Lout)
            cols = [win[:, b, :] for b in range(Bt)]      # Bt x (Cin, Lout)
            row_blocks.append(cols[0] if Bt == 1
                              else jnp.concatenate(cols, axis=1))
        return (row_blocks[0] if K == 1
                else jnp.concatenate(row_blocks, axis=0))  # (K*Cin, half)

    # (K*Cin + 1, 2*half): both phases side by side plus a ones row so the
    # MXU matmul also applies the bias.  Built entirely in registers.
    xcol = jnp.concatenate([phase_cols(0), phase_cols(1)], axis=1)
    ones = jnp.ones((1, 2 * half), dtype=xcol.dtype)
    xcol = jnp.concatenate([xcol, ones], axis=0)

    # Single MXU push: bf16 operands, f32 accumulation.
    y = jnp.dot(w_ref[...], xcol, preferred_element_type=jnp.float32)
    # MaxPool1d(2) = max over the two phases; ReLU commutes with max.
    pooled = jnp.maximum(jnp.maximum(y[:, :half], y[:, half:]), 0.0)
    o_ref[0] = pooled.astype(o_ref.dtype)


def conv_relu_pool(x, w, b, *, out_dtype=jnp.bfloat16, lane_target=1024):
    """x: (B, Cin, L), w: (K, Cout, Cin), b: (Cout,) -> (B, Cout, L//2)."""
    B, Cin, L = x.shape
    K, Cout, _ = w.shape
    assert K % 2 == 1, "phase/offset mapping assumes odd K (PyTorch pad=K//2)"
    assert L % 2 == 0, "MaxPool1d(2) path assumes even length"
    pad = K // 2
    Lout = L // 2
    Wh = Lout + pad                   # width of each even/odd half

    # Batch tile: fold batch rows into the matmul N dimension.  At these
    # sizes this collapses to a single grid step, which is optimal on the
    # single-TensorCore v5e/v6e (extra steps are pure pipeline overhead).
    # TODO(synk): on v7x (2 TensorCores) keep >=2 steps and verify the batch
    # axis actually core-shards (CORE_PARALLEL / explicit core_map).
    bt = max(1, min(B, lane_target // max(2 * Lout, 1)))
    while B % bt:
        bt -= 1
    nbt = B // bt

    # Wrapper-side glue (plain XLA): zero-pad, de-interleave even/odd columns,
    # merge phases + channels into one bf16 operand with batch on sublanes.
    # TODO(synk): this pad/de-interleave pass costs one extra HBM round trip
    # per layer; it could be fused into the producing kernel's epilogue.
    xp = jnp.pad(x.astype(jnp.bfloat16), ((0, 0), (0, 0), (pad, pad)))
    xeo = jnp.concatenate([xp[:, :, 0::2], xp[:, :, 1::2]], axis=1)   # (B, 2Cin, Wh)
    xin = xeo.reshape(nbt, bt, 2 * Cin, Wh).transpose(0, 2, 1, 3)     # (nbt, 2Cin, bt, Wh)

    # Conv taps flattened to (k, cin) rows; bias folded in as an extra column.
    w2 = jnp.transpose(w, (1, 0, 2)).reshape(Cout, K * Cin)
    wb = jnp.concatenate([w2, b.reshape(Cout, 1)], axis=1).astype(jnp.bfloat16)

    kernel = functools.partial(_conv_relu_pool_kernel,
                               K=K, Cin=Cin, Lout=Lout, Bt=bt)
    out = pl.pallas_call(
        kernel,
        out_shape=jax.ShapeDtypeStruct((nbt, Cout, bt * Lout), out_dtype),
        grid=(nbt,),
        in_specs=[
            pl.BlockSpec((1, 2 * Cin, bt, Wh), lambda i: (i, 0, 0, 0)),
            pl.BlockSpec((Cout, K * Cin + 1), lambda i: (0, 0)),
        ],
        out_specs=pl.BlockSpec((1, Cout, bt * Lout), lambda i: (i, 0, 0)),
        compiler_params=pltpu.CompilerParams(
            dimension_semantics=("parallel",)),
    )(xin, wb)

    # Lane-dense slab -> (B, Cout, Lout).
    out = out.reshape(nbt, Cout, bt, Lout).transpose(0, 2, 1, 3)
    return out.reshape(B, Cout, Lout)


def init_params(channels, kernels, key):
    """Deterministic Conv1d params, PyTorch-style uniform(-1/sqrt(fan_in), +)."""
    params = []
    for i in range(len(channels) - 1):
        cin, cout, k = channels[i], channels[i + 1], kernels[i]
        key, kw, kb = jax.random.split(key, 3)
        bound = 1.0 / (cin * k) ** 0.5
        w = jax.random.uniform(kw, (k, cout, cin), jnp.float32, -bound, bound)
        b = jax.random.uniform(kb, (cout,), jnp.float32, -bound, bound)
        params.append((w, b))
    return params


def simple_convolve_forward(x, params):
    """Mirrors SimpleConvolve.forward (inference mode)."""
    B = x.shape[0]
    x = x.reshape(B, -1, x.shape[1])      # same raw reshape as the torch code
    n = len(params)
    for i, (w, b) in enumerate(params):
        last = (i == n - 1)
        x = conv_relu_pool(x, w, b,
                           out_dtype=jnp.float32 if last else jnp.bfloat16)
        # TODO(synk): nn.Dropout(p=0.05) after non-first layers is the
        # identity at inference; training-mode stochastic masking is not
        # implemented.
    return x


def _reference_forward(x, params):
    """Pure-JAX f32 reference for correctness checking."""
    B = x.shape[0]
    x = x.reshape(B, -1, x.shape[1]).astype(jnp.float32)
    for (w, b) in params:
        K = w.shape[0]
        pad = K // 2
        L = x.shape[-1]
        xp = jnp.pad(x, ((0, 0), (0, 0), (pad, pad)))
        y = b[None, :, None] + sum(
            jnp.einsum('oc,bcl->bol', w[k], xp[:, :, k:k + L])
            for k in range(K))
        y = jnp.maximum(y, 0.0)
        x = jnp.maximum(y[:, :, 0::2], y[:, :, 1::2])
    return x


if __name__ == "__main__":
    # Small config consistent with the module: 2D input (B, L) reshaped to
    # (B, 1, L), so channels[0] = 1.
    channels = [1, 8, 16]
    kernels = [5, 3]
    B, L = 2, 64

    key = jax.random.PRNGKey(0)
    kx, kp = jax.random.split(key)
    x = jax.random.normal(kx, (B, L), jnp.float32)
    params = init_params(channels, kernels, kp)

    out = simple_convolve_forward(x, params)
    out = jax.block_until_ready(out)

    assert out.shape == (B, channels[-1], L // 4), out.shape
    ref = _reference_forward(x, params)
    # bf16 inputs/weights/intermediates with f32 MXU accumulation vs. the
    # pure-f32 reference.
    assert jnp.allclose(out, ref, atol=5e-2, rtol=5e-2), "mismatch vs reference"
    print("KERNEL_OK")
</pallas_src>

<mosaic_0001>
module attributes {stable_mosaic.version = 11 : i64} {
  func.func @_conv_relu_pool_kernel(%arg0: i32, %arg1: memref<1x2x2x34xbf16, #tpu.memory_space<vmem>>, %arg2: memref<8x6xbf16, #tpu.memory_space<vmem>>, %arg3: memref<1x8x64xbf16, #tpu.memory_space<vmem>>) attributes {dimension_semantics = [#tpu.dimension_semantics<parallel>], iteration_bounds = array<i64: 1>, scalar_prefetch = 0 : i64, scratch_operands = 0 : i64, tpu.core_type = #tpu.core_type<tc>, window_params = [{transform_indices = @transform_0, window_bounds = array<i64: 1, 2, 2, 34>}, {pipeline_mode = #tpu.pipeline_mode<synchronous>, transform_indices = @transform_1, window_bounds = array<i64: 8, 6>}, {transform_indices = @transform_2, window_bounds = array<i64: 1, 8, 64>}]} {
    %c0 = arith.constant 0 : index
    %c0_0 = arith.constant 0 : index
    %c0_1 = arith.constant 0 : index
    %c0_2 = arith.constant 0 : index
    %0 = vector.load %arg1[%c0, %c0_0, %c0_1, %c0_2] : memref<1x2x2x34xbf16, #tpu.memory_space<vmem>>, vector<1x2x2x34xbf16>
    %1 = vector.shape_cast %0 : vector<1x2x2x34xbf16> to vector<2x2x34xbf16>
    %2 = vector.extract_strided_slice %1 {offsets = [0, 0, 0], sizes = [1, 2, 34], strides = [1, 1, 1]} : vector<2x2x34xbf16> to vector<1x2x34xbf16>
    %3 = vector.extract_strided_slice %1 {offsets = [1, 0, 0], sizes = [1, 2, 34], strides = [1, 1, 1]} : vector<2x2x34xbf16> to vector<1x2x34xbf16>
    %4 = vector.extract_strided_slice %2 {offsets = [0, 0, 0], sizes = [1, 2, 32], strides = [1, 1, 1]} : vector<1x2x34xbf16> to vector<1x2x32xbf16>
    %5 = vector.extract_strided_slice %4 {offsets = [0, 0, 0], sizes = [1, 1, 32], strides = [1, 1, 1]} : vector<1x2x32xbf16> to vector<1x1x32xbf16>
    %6 = vector.shape_cast %5 : vector<1x1x32xbf16> to vector<1x32xbf16>
    %7 = vector.extract_strided_slice %4 {offsets = [0, 1, 0], sizes = [1, 1, 32], strides = [1, 1, 1]} : vector<1x2x32xbf16> to vector<1x1x32xbf16>
    %8 = vector.shape_cast %7 : vector<1x1x32xbf16> to vector<1x32xbf16>
    %9 = tpu.concatenate %6, %8 in 1 : vector<1x32xbf16>, vector<1x32xbf16> -> vector<1x64xbf16>
    %10 = vector.extract_strided_slice %3 {offsets = [0, 0, 0], sizes = [1, 2, 32], strides = [1, 1, 1]} : vector<1x2x34xbf16> to vector<1x2x32xbf16>
    %11 = vector.extract_strided_slice %10 {offsets = [0, 0, 0], sizes = [1, 1, 32], strides = [1, 1, 1]} : vector<1x2x32xbf16> to vector<1x1x32xbf16>
    %12 = vector.shape_cast %11 : vector<1x1x32xbf16> to vector<1x32xbf16>
    %13 = vector.extract_strided_slice %10 {offsets = [0, 1, 0], sizes = [1, 1, 32], strides = [1, 1, 1]} : vector<1x2x32xbf16> to vector<1x1x32xbf16>
    %14 = vector.shape_cast %13 : vector<1x1x32xbf16> to vector<1x32xbf16>
    %15 = tpu.concatenate %12, %14 in 1 : vector<1x32xbf16>, vector<1x32xbf16> -> vector<1x64xbf16>
    %16 = vector.extract_strided_slice %2 {offsets = [0, 0, 1], sizes = [1, 2, 32], strides = [1, 1, 1]} : vector<1x2x34xbf16> to vector<1x2x32xbf16>
    %17 = vector.extract_strided_slice %16 {offsets = [0, 0, 0], sizes = [1, 1, 32], strides = [1, 1, 1]} : vector<1x2x32xbf16> to vector<1x1x32xbf16>
    %18 = vector.shape_cast %17 : vector<1x1x32xbf16> to vector<1x32xbf16>
    %19 = vector.extract_strided_slice %16 {offsets = [0, 1, 0], sizes = [1, 1, 32], strides = [1, 1, 1]} : vector<1x2x32xbf16> to vector<1x1x32xbf16>
    %20 = vector.shape_cast %19 : vector<1x1x32xbf16> to vector<1x32xbf16>
    %21 = tpu.concatenate %18, %20 in 1 : vector<1x32xbf16>, vector<1x32xbf16> -> vector<1x64xbf16>
    %22 = vector.extract_strided_slice %3 {offsets = [0, 0, 1], sizes = [1, 2, 32], strides = [1, 1, 1]} : vector<1x2x34xbf16> to vector<1x2x32xbf16>
    %23 = vector.extract_strided_slice %22 {offsets = [0, 0, 0], sizes = [1, 1, 32], strides = [1, 1, 1]} : vector<1x2x32xbf16> to vector<1x1x32xbf16>
    %24 = vector.shape_cast %23 : vector<1x1x32xbf16> to vector<1x32xbf16>
    %25 = vector.extract_strided_slice %22 {offsets = [0, 1, 0], sizes = [1, 1, 32], strides = [1, 1, 1]} : vector<1x2x32xbf16> to vector<1x1x32xbf16>
    %26 = vector.shape_cast %25 : vector<1x1x32xbf16> to vector<1x32xbf16>
    %27 = tpu.concatenate %24, %26 in 1 : vector<1x32xbf16>, vector<1x32xbf16> -> vector<1x64xbf16>
    %28 = vector.extract_strided_slice %2 {offsets = [0, 0, 2], sizes = [1, 2, 32], strides = [1, 1, 1]} : vector<1x2x34xbf16> to vector<1x2x32xbf16>
    %29 = vector.extract_strided_slice %28 {offsets = [0, 0, 0], sizes = [1, 1, 32], strides = [1, 1, 1]} : vector<1x2x32xbf16> to vector<1x1x32xbf16>
    %30 = vector.shape_cast %29 : vector<1x1x32xbf16> to vector<1x32xbf16>
    %31 = vector.extract_strided_slice %28 {offsets = [0, 1, 0], sizes = [1, 1, 32], strides = [1, 1, 1]} : vector<1x2x32xbf16> to vector<1x1x32xbf16>
    %32 = vector.shape_cast %31 : vector<1x1x32xbf16> to vector<1x32xbf16>
    %33 = tpu.concatenate %30, %32 in 1 : vector<1x32xbf16>, vector<1x32xbf16> -> vector<1x64xbf16>
    %34 = tpu.concatenate %9, %15, %21, %27, %33 in 0 : vector<1x64xbf16>, vector<1x64xbf16>, vector<1x64xbf16>, vector<1x64xbf16>, vector<1x64xbf16> -> vector<5x64xbf16>
    %35 = vector.extract_strided_slice %3 {offsets = [0, 0, 0], sizes = [1, 2, 32], strides = [1, 1, 1]} : vector<1x2x34xbf16> to vector<1x2x32xbf16>
    %36 = vector.extract_strided_slice %35 {offsets = [0, 0, 0], sizes = [1, 1, 32], strides = [1, 1, 1]} : vector<1x2x32xbf16> to vector<1x1x32xbf16>
    %37 = vector.shape_cast %36 : vector<1x1x32xbf16> to vector<1x32xbf16>
    %38 = vector.extract_strided_slice %35 {offsets = [0, 1, 0], sizes = [1, 1, 32], strides = [1, 1, 1]} : vector<1x2x32xbf16> to vector<1x1x32xbf16>
    %39 = vector.shape_cast %38 : vector<1x1x32xbf16> to vector<1x32xbf16>
    %40 = tpu.concatenate %37, %39 in 1 : vector<1x32xbf16>, vector<1x32xbf16> -> vector<1x64xbf16>
    %41 = vector.extract_strided_slice %2 {offsets = [0, 0, 1], sizes = [1, 2, 32], strides = [1, 1, 1]} : vector<1x2x34xbf16> to vector<1x2x32xbf16>
    %42 = vector.extract_strided_slice %41 {offsets = [0, 0, 0], sizes = [1, 1, 32], strides = [1, 1, 1]} : vector<1x2x32xbf16> to vector<1x1x32xbf16>
    %43 = vector.shape_cast %42 : vector<1x1x32xbf16> to vector<1x32xbf16>
    %44 = vector.extract_strided_slice %41 {offsets = [0, 1, 0], sizes = [1, 1, 32], strides = [1, 1, 1]} : vector<1x2x32xbf16> to vector<1x1x32xbf16>
    %45 = vector.shape_cast %44 : vector<1x1x32xbf16> to vector<1x32xbf16>
    %46 = tpu.concatenate %43, %45 in 1 : vector<1x32xbf16>, vector<1x32xbf16> -> vector<1x64xbf16>
    %47 = vector.extract_strided_slice %3 {offsets = [0, 0, 1], sizes = [1, 2, 32], strides = [1, 1, 1]} : vector<1x2x34xbf16> to vector<1x2x32xbf16>
    %48 = vector.extract_strided_slice %47 {offsets = [0, 0, 0], sizes = [1, 1, 32], strides = [1, 1, 1]} : vector<1x2x32xbf16> to vector<1x1x32xbf16>
    %49 = vector.shape_cast %48 : vector<1x1x32xbf16> to vector<1x32xbf16>
    %50 = vector.extract_strided_slice %47 {offsets = [0, 1, 0], sizes = [1, 1, 32], strides = [1, 1, 1]} : vector<1x2x32xbf16> to vector<1x1x32xbf16>
    %51 = vector.shape_cast %50 : vector<1x1x32xbf16> to vector<1x32xbf16>
    %52 = tpu.concatenate %49, %51 in 1 : vector<1x32xbf16>, vector<1x32xbf16> -> vector<1x64xbf16>
    %53 = vector.extract_strided_slice %2 {offsets = [0, 0, 2], sizes = [1, 2, 32], strides = [1, 1, 1]} : vector<1x2x34xbf16> to vector<1x2x32xbf16>
    %54 = vector.extract_strided_slice %53 {offsets = [0, 0, 0], sizes = [1, 1, 32], strides = [1, 1, 1]} : vector<1x2x32xbf16> to vector<1x1x32xbf16>
    %55 = vector.shape_cast %54 : vector<1x1x32xbf16> to vector<1x32xbf16>
    %56 = vector.extract_strided_slice %53 {offsets = [0, 1, 0], sizes = [1, 1, 32], strides = [1, 1, 1]} : vector<1x2x32xbf16> to vector<1x1x32xbf16>
    %57 = vector.shape_cast %56 : vector<1x1x32xbf16> to vector<1x32xbf16>
    %58 = tpu.concatenate %55, %57 in 1 : vector<1x32xbf16>, vector<1x32xbf16> -> vector<1x64xbf16>
    %59 = vector.extract_strided_slice %3 {offsets = [0, 0, 2], sizes = [1, 2, 32], strides = [1, 1, 1]} : vector<1x2x34xbf16> to vector<1x2x32xbf16>
    %60 = vector.extract_strided_slice %59 {offsets = [0, 0, 0], sizes = [1, 1, 32], strides = [1, 1, 1]} : vector<1x2x32xbf16> to vector<1x1x32xbf16>
    %61 = vector.shape_cast %60 : vector<1x1x32xbf16> to vector<1x32xbf16>
    %62 = vector.extract_strided_slice %59 {offsets = [0, 1, 0], sizes = [1, 1, 32], strides = [1, 1, 1]} : vector<1x2x32xbf16> to vector<1x1x32xbf16>
    %63 = vector.shape_cast %62 : vector<1x1x32xbf16> to vector<1x32xbf16>
    %64 = tpu.concatenate %61, %63 in 1 : vector<1x32xbf16>, vector<1x32xbf16> -> vector<1x64xbf16>
    %65 = tpu.concatenate %40, %46, %52, %58, %64 in 0 : vector<1x64xbf16>, vector<1x64xbf16>, vector<1x64xbf16>, vector<1x64xbf16>, vector<1x64xbf16> -> vector<5x64xbf16>
    %66 = tpu.concatenate %34, %65 in 1 : vector<5x64xbf16>, vector<5x64xbf16> -> vector<5x128xbf16>
    %cst = arith.constant 1.000000e+00 : bf16
    %67 = vector.broadcast %cst : bf16 to vector<1x128xbf16>
    %68 = tpu.concatenate %66, %67 in 0 : vector<5x128xbf16>, vector<1x128xbf16> -> vector<6x128xbf16>
    %c0_3 = arith.constant 0 : index
    %c0_4 = arith.constant 0 : index
    %69 = vector.load %arg2[%c0_3, %c0_4] : memref<8x6xbf16, #tpu.memory_space<vmem>>, vector<8x6xbf16>
    %cst_5 = arith.constant dense<0.000000e+00> : vector<8x128xf32>
    %70 = tpu.matmul %69, %68, %cst_5 {dimension_numbers = #tpu.dot_dimension_numbers<[1], [0], [0], [1], [0, 0, 1, 1], [], []>} : vector<8x6xbf16>, vector<6x128xbf16>, vector<8x128xf32> -> vector<8x128xf32>
    %71 = vector.extract_strided_slice %70 {offsets = [0, 0], sizes = [8, 64], strides = [1, 1]} : vector<8x128xf32> to vector<8x64xf32>
    %72 = vector.extract_strided_slice %70 {offsets = [0, 64], sizes = [8, 64], strides = [1, 1]} : vector<8x128xf32> to vector<8x64xf32>
    %73 = arith.maximumf %71, %72 : vector<8x64xf32>
    %cst_6 = arith.constant 0.000000e+00 : f32
    %74 = vector.broadcast %cst_6 : f32 to vector<8x64xf32>
    %75 = arith.maximumf %73, %74 : vector<8x64xf32>
    %76 = arith.truncf %75 : vector<8x64xf32> to vector<8x64xbf16>
    %c0_7 = arith.constant 0 : index
    %c0_8 = arith.constant 0 : index
    %c0_9 = arith.constant 0 : index
    %77 = vector.load %arg3[%c0_7, %c0_8, %c0_9] : memref<1x8x64xbf16, #tpu.memory_space<vmem>>, vector<1x8x64xbf16>
    %78 = vector.shape_cast %77 : vector<1x8x64xbf16> to vector<8x64xbf16>
    %79 = vector.shape_cast %76 : vector<8x64xbf16> to vector<1x8x64xbf16>
    tpu.vector_store %arg3[%c0_7, %c0_8, %c0_9], %79 {strides = array<i32>} : memref<1x8x64xbf16, #tpu.memory_space<vmem>>, vector<1x8x64xbf16>,
    return
  }
  func.func @transform_0(%arg0: i32) -> (i32, i32, i32, i32) {
    %c0_i32 = arith.constant 0 : i32
    %c0_i32_0 = arith.constant 0 : i32
    %c0_i32_1 = arith.constant 0 : i32
    %c0_i32_2 = arith.constant 0 : i32
    return %arg0, %c0_i32, %c0_i32_0, %c0_i32_1 : i32, i32, i32, i32
  }
  func.func @transform_1(%arg0: i32) -> (i32, i32) {
    %c0_i32 = arith.constant 0 : i32
    %c0_i32_0 = arith.constant 0 : i32
    %c0_i32_1 = arith.constant 0 : i32
    return %c0_i32, %c0_i32_0 : i32, i32
  }
  func.func @transform_2(%arg0: i32) -> (i32, i32, i32) {
    %c0_i32 = arith.constant 0 : i32
    %c0_i32_0 = arith.constant 0 : i32
    %c0_i32_1 = arith.constant 0 : i32
    return %arg0, %c0_i32, %c0_i32_0 : i32, i32, i32
  }
}

</mosaic_0001>

<llo_original>
// kernel: tpu_custom_call.1
$region0: #{tpu_custom_call.1}
  #allocation0 [shape = 'u32[]', space=smem, size = 0x4, offset = 0x4, fixed_abs, tag = 'smem constant byte address 0x4 - core index']
  #allocation1 [shape = 'u32[144,128]{1,0:T(1,128)}', space=vmem, size = 0x12000, scoped, tag = 'internal scratch']
  %s0 = inlined_call_operand.hbm [shape: bf16[1,2,2,34], index: 0, kind: input, shape index: {}]
  %s1 = inlined_call_operand.hbm [shape: bf16[8,6], index: 1, kind: input, shape index: {}]
  %s2 = inlined_call_operand.hbm [shape: bf16[1,8,64], index: 2, kind: output, shape index: {}]
  %s3 = sld [smem:[#allocation0]]
  $region26: #{tpu_custom_call.1} parent=0
    _
  %s5 = ssub.s32 1, %s3
  %s6 = scalar_select 0, %s5, %s3
  $region1: #{tpu_custom_call.1} parent=0
    #allocation2 [shape = 'u8[1024]{0}', space=vmem, size = 0x400, scoped, tag = 'input window, operand 0, single buffered']
    #allocation3 [shape = 's32[1]{0}', space=sflag, size = 0x4, scoped, tag = 'scoped memory for tpu_custom_call.1']
    #allocation4 [shape = 's32[1]{0}', space=sflag, size = 0x4, scoped, tag = 'scoped memory for tpu_custom_call.1']
    #allocation5 [shape = 'u8[2048]{0}', space=vmem, size = 0x800, scoped, tag = 'input window, operand 1, single buffered']
    #allocation6 [shape = 's32[1]{0}', space=sflag, size = 0x4, scoped, tag = 'scoped memory for tpu_custom_call.1']
    #allocation7 [shape = 'u8[2048]{0}', space=vmem, size = 0x800, scoped, tag = 'output window, operand 0, single buffered']
    %7 = vsyncpa [#allocation3], 0
    %8 = vsyncpa [#allocation6], 0
    %9 = vsyncpa [#allocation4], 0
    // Predicated region
    $region2: #{tpu_custom_call.1} parent=1 // pred_check
      _
    $region3: #{tpu_custom_call.1} parent=1 // pred_check_branch
      %11 = sbr.rel (0) target = $region5
    $region4: #{tpu_custom_call.1} parent=1 // pred_region
      %s13 = ssub.s32 32, 32
      %14 = vsyncadd [#allocation3], %s13
      %s15 = sshll.u32 [#allocation2], 4
      %s16 = int_to_ptr.vmem [resolvable:$true] %s15
      %21 = dma.hbm_to_vmem [thread:$0]  %s0, 32, %s16, [#allocation3], 16, 16, 1
    $region5: #{tpu_custom_call.1} parent=1 // pred_fallthru
      _
    // Predicated region
    $region6: #{tpu_custom_call.1} parent=1 // pred_check
      _
    $region7: #{tpu_custom_call.1} parent=1 // pred_check_branch
      %23 = sbr.rel (0) target = $region9
    $region8: #{tpu_custom_call.1} parent=1 // pred_region
      %s25 = ssub.s32 64, 64
      %26 = vsyncadd [#allocation6], %s25
      %s28 = sshll.u32 [#allocation5], 4
      %s29 = int_to_ptr.vmem [resolvable:$true] %s28
      %31 = dma.hbm_to_vmem [thread:$0]  %s1, 64, %s29, [#allocation6]
    $region9: #{tpu_custom_call.1} parent=1 // pred_fallthru
      _
    // Predicated region
    $region10: #{tpu_custom_call.1} parent=1 // pred_check
      _
    $region11: #{tpu_custom_call.1} parent=1 // pred_check_branch
      %33 = sbr.rel (0) target = $region13
    $region12: #{tpu_custom_call.1} parent=1 // pred_region
      %34 = dma.done [#allocation3], 32
    $region13: #{tpu_custom_call.1} parent=1 // pred_fallthru
      _
    // Predicated region
    $region14: #{tpu_custom_call.1} parent=1 // pred_check
      _
    $region15: #{tpu_custom_call.1} parent=1 // pred_check_branch
      %36 = sbr.rel (0) target = $region17
    $region16: #{tpu_custom_call.1} parent=1 // pred_region
      %37 = dma.done [#allocation6], 64
    $region17: #{tpu_custom_call.1} parent=1 // pred_fallthru
      _
    %v40 = vld [vmem:[#allocation2] sm:$0x1]
    %v41 = vld [vmem:[#allocation2 + $0x1] sm:$0x1]
    %v44 = vunpack.c.l.s4 1966171168
    %v45 = vunpack.c.0.s8 %v44
    %v46 = vlaneseq
    %v47 = vshrl.u32 %v46, 7
    %v48 = vsub.s32 %v45, %v47
    %v49 = vrot.slane %v40, %v48
    %v51 = vunpack.c.l.s4 1966171168
    %v52 = vunpack.c.0.s8 %v51
    %v53 = vlaneseq
    %v54 = vshrl.u32 %v53, 7
    %v55 = vsub.s32 %v52, %v54
    %v56 = vrot.slane %v49, %v55
    %v58 = vshrl.u32 %v56, 16
    %60 = vrot.lane.b32.xlu0 %v58, 32
    %v61 = vpop.permute.xlu0 %60
    %vm62 = vcmask 261120
    %v65 = vsel %vm62, %v40, %v61
    %v69 = vunpack.c.l.s4 1966171168
    %v70 = vunpack.c.0.s8 %v69
    %v71 = vlaneseq
    %v72 = vshrl.u32 %v71, 7
    %v73 = vsub.s32 %v70, %v72
    %v74 = vrot.slane %v41, %v73
    %v76 = vunpack.c.l.s4 1966171168
    %v77 = vunpack.c.0.s8 %v76
    %v78 = vlaneseq
    %v79 = vshrl.u32 %v78, 7
    %v80 = vsub.s32 %v77, %v79
    %v81 = vrot.slane %v74, %v80
    %v83 = vshrl.u32 %v81, 16
    %85 = vrot.lane.b32.xlu0 %v83, 32
    %v86 = vpop.permute.xlu0 %85
    %v89 = vsel %vm62, %v41, %v86
    %91 = vrot.lane.b32.xlu0 %v56, 127
    %v92 = vpop.permute.xlu0 %91
    %93 = vrot.lane.b32.xlu0 %v58, 31
    %v94 = vpop.permute.xlu0 %93
    %v97 = vsel %vm62, %v92, %v94
    %98 = vrot.lane.b32.xlu0 %v81, 127
    %v99 = vpop.permute.xlu0 %98
    %100 = vrot.lane.b32.xlu0 %v83, 31
    %v101 = vpop.permute.xlu0 %100
    %v104 = vsel %vm62, %v99, %v101
    %105 = vrot.lane.b32.xlu0 %v56, 126
    %v106 = vpop.permute.xlu0 %105
    %107 = vrot.lane.b32.xlu0 %v58, 30
    %v108 = vpop.permute.xlu0 %107
    %v111 = vsel %vm62, %v106, %v108
    %v112 = vshll.u32 %v89, 16
    %v116 = vrot.slane %v97, 7
    %v117 = vshll.u32 %v104, 16
    %v119 = vrot.slane %v117, 7
    %v122 = vrot.slane %v111, 6
    %vm123 = vcmask 1040384
    %vm124 = vsmask.f32 256
    %vm125 = vmand %vm123, %vm124
    %v126 = vsel %vm125, %v65, %v112
    %vm127 = vcmask 1040384
    %v130 = vsel %vm127, %v126, %v116
    %vm132 = vcmask 1041408
    %vm133 = vsmask.f32 1280
    %vm134 = vmand %vm132, %vm133
    %v135 = vsel %vm134, %v130, %v119
    %vm136 = vcmask 1041408
    %v139 = vsel %vm136, %v135, %v122
    %140 = vrot.lane.b32.xlu0 %v81, 126
    %v141 = vpop.permute.xlu0 %140
    %142 = vrot.lane.b32.xlu0 %v83, 30
    %v143 = vpop.permute.xlu0 %142
    %v146 = vsel %vm62, %v141, %v143
    %v147 = vshll.u32 %v97, 16
    %v151 = vrot.slane %v104, 7
    %v152 = vshll.u32 %v111, 16
    %v154 = vrot.slane %v152, 7
    %v157 = vrot.slane %v146, 6
    %v158 = vsel %vm125, %v89, %v147
    %v161 = vsel %vm127, %v158, %v151
    %v163 = vsel %vm134, %v161, %v154
    %v166 = vsel %vm136, %v163, %v157
    %168 = vrot.lane.b32.xlu0 %v166, 64
    %v169 = vpop.permute.xlu0 %168
    %vm170 = vcmask 523264
    %v172 = vsel %vm170, %v139, %v169
    %vm174 = vcmask 1042432
    %vm175 = vsmask.f32 2304
    %vm176 = vmand %vm174, %vm175
    %v177 = vsel %vm176, %v172, 1065369472
    %v178 = vld [vmem:[#allocation5] sm:$0xf]
    %vm179 = vcmask 48128
    %v181 = vsel %vm179, %v178, 0
    %vm183 = vcmask 1042432
    %v185 = vsel %vm183, %v177, 0
    %187 = vmatprep.subr.bf16.mxu0 0
    %188 = vmatpush1.bf16.msra.mxu0 0
    %189 = vmatprep.subr.bf16.mxu0 0
    %190 = vmatpush1.bf16.msra.mxu0 0
    %191 = vmatprep.subr.bf16.mxu0 0
    %192 = vmatpush1.bf16.msra.mxu0 0
    %193 = vmatprep.subr.bf16.mxu0 0
    %194 = vmatpush1.bf16.msra.mxu0 0
    %195 = vmatprep.subr.bf16.mxu0 0
    %196 = vmatpush1.bf16.msra.mxu0 0
    %197 = vmatprep.subr.bf16.mxu0 0
    %198 = vmatpush1.bf16.msra.mxu0 0
    %199 = vmatprep.subr.bf16.mxu0 0
    %200 = vmatpush1.bf16.msra.mxu0 0
    %201 = vmatprep.subr.bf16.mxu0 0
    %202 = vmatpush1.bf16.msra.mxu0 %v185
    %203 = vmatprep.subr.bf16.mxu0 0
    %204 = vmatpush2.bf16.msra.mxu0 0
    %205 = vmatprep.subr.bf16.mxu0 0
    %206 = vmatpush2.bf16.msra.mxu0 0
    %207 = vmatprep.subr.bf16.mxu0 0
    %208 = vmatpush2.bf16.msra.mxu0 0
    %209 = vmatprep.subr.bf16.mxu0 0
    %210 = vmatpush2.bf16.msra.mxu0 0
    %211 = vmatprep.subr.bf16.mxu0 0
    %212 = vmatpush2.bf16.msra.mxu0 0
    %213 = vmatprep.subr.bf16.mxu0 0
    %214 = vmatpush2.bf16.msra.mxu0 0
    %215 = vmatprep.subr.bf16.mxu0 0
    %216 = vmatpush2.bf16.msra.mxu0 0
    %217 = vmatprep.subr.bf16.mxu0 0
    %218 = vmatpush2.bf16.msra.mxu0 0
    %219 = vmatprep.mubr.bf16.mxu0 0
    %220 = vmatmul.mubr.bf16.gmra.mxu0 %v181
    %v221 = vpop.f32.mrf.mxu0
    %v222 = vadd.f32 0.0, %v221
    %v223 = vpop.f32.mrf.mxu0
    %v224 = vpop.f32.mrf.mxu0
    %v225 = vpop.f32.mrf.mxu0
    %226 = vdwg.mxu0
    %228 = vrot.lane.b32.xlu0 %v222, 64
    %v229 = vpop.permute.xlu0 %228
    %v231 = vmax.f32 %v222, %v229
    %v232 = vmax.f32 %v231, 0.0
    %v233 = vpack.c.bf16 %v232, %v232
    %vm234 = vcmask 519168
    %235 = vst.msk [vmem:[#allocation7] sm:$0xf] %vm234, %v233
    // Predicated region
    $region18: #{tpu_custom_call.1} parent=1 // pred_check
      _
    $region19: #{tpu_custom_call.1} parent=1 // pred_check_branch
      %237 = sbr.rel (0) target = $region21
    $region20: #{tpu_custom_call.1} parent=1 // pred_region
      %s239 = ssub.s32 64, 64
      %240 = vsyncadd [#allocation4], %s239
      %s242 = sshll.u32 [#allocation7], 4
      %s243 = int_to_ptr.vmem [resolvable:$true] %s242
      %245 = dma.vmem_to_hbm [thread:$0]  %s243, 64, %s2, [#allocation4]
    $region21: #{tpu_custom_call.1} parent=1 // pred_fallthru
      _
    // Predicated region
    $region22: #{tpu_custom_call.1} parent=1 // pred_check
      _
    $region23: #{tpu_custom_call.1} parent=1 // pred_check_branch
      %247 = sbr.rel (0) target = $region25
    $region24: #{tpu_custom_call.1} parent=1 // pred_region
      %248 = dma.done [#allocation4], 64
    $region25: #{tpu_custom_call.1} parent=1 // pred_fallthru
      _
    %249 = vsyncpa [#allocation3], 1
    %250 = vsyncpa [#allocation6], 1
    %251 = vsyncpa [#allocation4], 1

</llo_original>
